<compile_context>
chip_gen: v6e
topology: v6e:2x2x1
jax: 0.10.0
libtpu: 0.0.40
codegen_flags: <defaults>
</compile_context>

<pallas_src>
import functools

import jax
import jax.numpy as jnp
from jax.experimental import pallas as pl
from jax.experimental.pallas import tpu as pltpu


def _round_up(x, m):
    return ((x + m - 1) // m) * m


# ---------------------------------------------------------------------------
# shared per-step math (values in, values out; all operands pre-hoisted)
# ---------------------------------------------------------------------------
def _rnn_step(x_cd, h, w1, wg, w2, b1_b, brz_b, bnih_b, bnhh_b, b2_b):
    """One fc1->ReLU->GRUCell->fc2 step.

    x_cd is already in the matmul operand dtype; h and all bias adds / gate
    math are f32.  H here is the padded hidden width (multiple of 128), so
    every slice below is lane-aligned.
    """
    Hp = h.shape[1]
    cd = w1.dtype

    # fc1 + ReLU
    xh = jnp.maximum(
        jnp.dot(x_cd, w1, preferred_element_type=jnp.float32) + b1_b, 0.0)

    # Single fused gate matmul: [xh | h] (B, 2H) @ (2H, 4H)
    #   g[:, 0:2H]  = (W_ih + W_hh) r/z pre-activations (pre-summed)
    #   g[:, 2H:3H] = W_ih_n xh   (input half of the n gate)
    #   g[:, 3H:4H] = W_hh_n h    (hidden half of the n gate)
    xhh = jnp.concatenate([xh.astype(cd), h.astype(cd)], axis=1)
    g = jnp.dot(xhh, wg, preferred_element_type=jnp.float32)

    rz = jax.nn.sigmoid(g[:, :2 * Hp] + brz_b)
    r = rz[:, :Hp]
    z = rz[:, Hp:]
    n = jnp.tanh(g[:, 2 * Hp:3 * Hp] + bnih_b + r * (g[:, 3 * Hp:] + bnhh_b))
    h_new = (1.0 - z) * n + z * h

    # fc2 (output padded to a lane-dense 128-multiple width)
    q = jnp.dot(h_new.astype(cd), w2, preferred_element_type=jnp.float32) + b2_b
    return q, h_new


def _broadcast_biases(B, b1_ref, brz_ref, bnih_ref, bnhh_ref, b2_ref):
    """Broadcast (1, .) biases to (B, .) ONCE (JAX does not CSE broadcasts)."""
    Hp = b1_ref.shape[1]
    Ap = b2_ref.shape[1]
    return (jnp.broadcast_to(b1_ref[...], (B, Hp)),
            jnp.broadcast_to(brz_ref[...], (B, 2 * Hp)),
            jnp.broadcast_to(bnih_ref[...], (B, Hp)),
            jnp.broadcast_to(bnhh_ref[...], (B, Hp)),
            jnp.broadcast_to(b2_ref[...], (B, Ap)))


# ---------------------------------------------------------------------------
# kernels
# ---------------------------------------------------------------------------
def rnn_agent_kernel(x_ref, h_ref, w1_ref, b1_ref, wg_ref, brz_ref,
                     bnih_ref, bnhh_ref, w2_ref, b2_ref,
                     q_out_ref, h_out_ref):
    """Single step (matches the PyTorch module forward)."""
    B = h_ref.shape[0]
    biases = _broadcast_biases(B, b1_ref, brz_ref, bnih_ref, bnhh_ref, b2_ref)
    q, h_new = _rnn_step(x_ref[...], h_ref[...], w1_ref[...], wg_ref[...],
                         w2_ref[...], *biases)
    q_out_ref[...] = q
    h_out_ref[...] = h_new


def rnn_agent_rollout_kernel(x_ref, h0_ref, w1_ref, b1_ref, wg_ref, brz_ref,
                             bnih_ref, bnhh_ref, w2_ref, b2_ref,
                             q_out_ref, h_out_ref, *, unroll):
    """T steps in one kernel invocation: everything VMEM-resident, the hidden
    state is a fori_loop carry (no per-step grid / h write-back)."""
    T = x_ref.shape[0]
    B = h0_ref.shape[0]

    # Loop-invariant hoists: weights loaded and biases broadcast exactly once.
    w1 = w1_ref[...]
    wg = wg_ref[...]
    w2 = w2_ref[...]
    b1_b, brz_b, bnih_b, bnhh_b, b2_b = _broadcast_biases(
        B, b1_ref, brz_ref, bnih_ref, bnhh_ref, b2_ref)

    def body(t, h):
        q, h_new = _rnn_step(x_ref[t], h, w1, wg, w2,
                             b1_b, brz_b, bnih_b, bnhh_b, b2_b)
        q_out_ref[t] = q
        return h_new

    h_final = jax.lax.fori_loop(0, T, body, h0_ref[...], unroll=unroll)
    h_out_ref[...] = h_final


# ---------------------------------------------------------------------------
# host-side parameter handling
# ---------------------------------------------------------------------------
def init_params(key, input_dim, hidden_dim, n_actions):
    """Deterministic synthetic params in PyTorch-like per-gate layout."""
    ks = jax.random.split(key, 8)

    def u(k, shape, bound):
        return jax.random.uniform(k, shape, jnp.float32, -bound, bound)

    b_fc1 = 1.0 / jnp.sqrt(input_dim)
    b_gru = 1.0 / jnp.sqrt(hidden_dim)
    b_fc2 = 1.0 / jnp.sqrt(hidden_dim)
    return {
        "w1":   u(ks[0], (input_dim, hidden_dim), b_fc1),
        "b1":   u(ks[1], (1, hidden_dim), b_fc1),
        "w_ih": u(ks[2], (3, hidden_dim, hidden_dim), b_gru),   # [r, z, n]
        "b_ih": u(ks[3], (3, 1, hidden_dim), b_gru),
        "w_hh": u(ks[4], (3, hidden_dim, hidden_dim), b_gru),
        "b_hh": u(ks[5], (3, 1, hidden_dim), b_gru),
        "w2":   u(ks[6], (hidden_dim, n_actions), b_fc2),
        "b2":   u(ks[7], (1, n_actions), b_fc2),
    }


def pack_params(p, matmul_dtype=jnp.bfloat16):
    """Pad everything to 128-lane multiples, fuse the six GRU gate weights
    into one (2H, 4H) stacked matrix, fold the r/z biases, pad fc2 outputs.

    All padded bias lanes are explicitly zero so padded hidden lanes stay 0.
    """
    Din, H = p["w1"].shape
    A = p["w2"].shape[1]
    Dp = _round_up(Din, 128)
    Hp = _round_up(H, 128)
    Ap = _round_up(A, 128)
    md = matmul_dtype

    w1 = jnp.zeros((Dp, Hp), jnp.float32).at[:Din, :H].set(p["w1"])
    b1 = jnp.zeros((1, Hp), jnp.float32).at[:, :H].set(p["b1"])

    wih, whh = p["w_ih"], p["w_hh"]
    wg = jnp.zeros((2 * Hp, 4 * Hp), jnp.float32)
    # rows 0:Hp multiply xh, rows Hp:2Hp multiply h_in
    wg = wg.at[:H, 0 * Hp:0 * Hp + H].set(wih[0])          # r   (input)
    wg = wg.at[:H, 1 * Hp:1 * Hp + H].set(wih[1])          # z   (input)
    wg = wg.at[:H, 2 * Hp:2 * Hp + H].set(wih[2])          # n_i (input)
    wg = wg.at[Hp:Hp + H, 0 * Hp:0 * Hp + H].set(whh[0])   # r   (hidden)
    wg = wg.at[Hp:Hp + H, 1 * Hp:1 * Hp + H].set(whh[1])   # z   (hidden)
    wg = wg.at[Hp:Hp + H, 3 * Hp:3 * Hp + H].set(whh[2])   # n_h (hidden)

    b_rz = jnp.zeros((1, 2 * Hp), jnp.float32)
    b_rz = b_rz.at[:, :H].set(p["b_ih"][0] + p["b_hh"][0])
    b_rz = b_rz.at[:, Hp:Hp + H].set(p["b_ih"][1] + p["b_hh"][1])
    bn_ih = jnp.zeros((1, Hp), jnp.float32).at[:, :H].set(p["b_ih"][2])
    bn_hh = jnp.zeros((1, Hp), jnp.float32).at[:, :H].set(p["b_hh"][2])

    w2 = jnp.zeros((Hp, Ap), jnp.float32).at[:H, :A].set(p["w2"])
    b2 = jnp.zeros((1, Ap), jnp.float32).at[:, :A].set(p["b2"])

    return {
        "w1": w1.astype(md), "b1": b1,
        "w_g": wg.astype(md),
        "b_rz": b_rz, "bn_ih": bn_ih, "bn_hh": bn_hh,
        "w2": w2.astype(md), "b2": b2,
        "dims": {"Din": Din, "H": H, "A": A,
                 "Dp": Dp, "Hp": Hp, "Ap": Ap, "md": md},
    }


_WEIGHT_KEYS = ("w1", "b1", "w_g", "b_rz", "bn_ih", "bn_hh", "w2", "b2")


def _cost_estimate(packed, Bp, T):
    d = packed["dims"]
    Dp, Hp, Ap = d["Dp"], d["Hp"], d["Ap"]
    flops = 2 * T * Bp * (Dp * Hp + (2 * Hp) * (4 * Hp) + Hp * Ap)
    transcendentals = T * Bp * 3 * Hp          # sigmoid(2H) + tanh(H)
    w_bytes = sum(int(packed[k].size) * packed[k].dtype.itemsize
                  for k in _WEIGHT_KEYS)
    act_itemsize = jnp.dtype(d["md"]).itemsize
    act_bytes = T * Bp * (Dp * act_itemsize + Ap * 4) + 2 * Bp * Hp * 4
    return pl.CostEstimate(flops=int(flops),
                           transcendentals=int(transcendentals),
                           bytes_accessed=int(w_bytes + act_bytes))


def _pad_batch(md):
    # bf16 operands pack 16 rows/sublane-tile, f32 packs 8
    return 16 if jnp.dtype(md) == jnp.dtype(jnp.bfloat16) else 8


_VMEM = pl.BlockSpec(memory_space=pltpu.MemorySpace.VMEM)


# ---------------------------------------------------------------------------
# wrappers
# ---------------------------------------------------------------------------
def rnn_agent_forward(inputs, hidden_state, packed):
    """Single step (matches the PyTorch module's forward). Prefer
    rnn_agent_rollout when stepping a whole sequence."""
    d = packed["dims"]
    B, Din = inputs.shape
    assert Din == d["Din"]
    Bp = _round_up(B, _pad_batch(d["md"]))

    x_p = jnp.zeros((Bp, d["Dp"]), d["md"]).at[:B, :Din].set(
        inputs.astype(d["md"]))
    h_p = jnp.zeros((Bp, d["Hp"]), jnp.float32).at[:B, :d["H"]].set(
        hidden_state.reshape(-1, d["H"]))

    q_p, h_new_p = pl.pallas_call(
        rnn_agent_kernel,
        out_shape=(jax.ShapeDtypeStruct((Bp, d["Ap"]), jnp.float32),
                   jax.ShapeDtypeStruct((Bp, d["Hp"]), jnp.float32)),
        in_specs=[_VMEM] * 10,
        out_specs=(_VMEM, _VMEM),
        cost_estimate=_cost_estimate(packed, Bp, 1),
    )(x_p, h_p,
      packed["w1"], packed["b1"], packed["w_g"],
      packed["b_rz"], packed["bn_ih"], packed["bn_hh"],
      packed["w2"], packed["b2"])
    return q_p[:B, :d["A"]], h_new_p[:B, :d["H"]]


def rnn_agent_rollout(x_seq, h0, packed):
    """T sequential steps in ONE pallas_call: in-kernel fori_loop over time,
    x_seq / q_seq / weights fully VMEM-resident, hidden carried as a value.
    Total VMEM footprint at these shapes is <1 MiB (fits every generation;
    on v7x the scoped default of 32 MiB is ample)."""
    d = packed["dims"]
    T, B, Din = x_seq.shape
    assert Din == d["Din"]
    Bp = _round_up(B, _pad_batch(d["md"]))

    x_p = jnp.zeros((T, Bp, d["Dp"]), d["md"]).at[:, :B, :Din].set(
        x_seq.astype(d["md"]))
    h_p = jnp.zeros((Bp, d["Hp"]), jnp.float32).at[:B, :d["H"]].set(
        h0.reshape(-1, d["H"]))

    unroll = True if T <= 16 else 8
    kernel = functools.partial(rnn_agent_rollout_kernel, unroll=unroll)

    q_p, h_T_p = pl.pallas_call(
        kernel,
        out_shape=(jax.ShapeDtypeStruct((T, Bp, d["Ap"]), jnp.float32),
                   jax.ShapeDtypeStruct((Bp, d["Hp"]), jnp.float32)),
        in_specs=[_VMEM] * 10,
        out_specs=(_VMEM, _VMEM),
        cost_estimate=_cost_estimate(packed, Bp, T),
    )(x_p, h_p,
      packed["w1"], packed["b1"], packed["w_g"],
      packed["b_rz"], packed["bn_ih"], packed["bn_hh"],
      packed["w2"], packed["b2"])
    return q_p[:, :B, :d["A"]], h_T_p[:B, :d["H"]]


# ---------------------------------------------------------------------------
# pure-JAX reference (PyTorch GRUCell semantics, raw per-gate params)
# ---------------------------------------------------------------------------
def reference_forward(inputs, hidden_state, p):
    x = jnp.maximum(inputs @ p["w1"] + p["b1"], 0.0)
    gi = [x @ p["w_ih"][i] + p["b_ih"][i] for i in range(3)]
    gh = [hidden_state @ p["w_hh"][i] + p["b_hh"][i] for i in range(3)]
    r = jax.nn.sigmoid(gi[0] + gh[0])
    z = jax.nn.sigmoid(gi[1] + gh[1])
    n = jnp.tanh(gi[2] + r * gh[2])
    h = (1.0 - z) * n + z * hidden_state
    q = h @ p["w2"] + p["b2"]
    return q, h


if __name__ == "__main__":
    B, D_IN, H, A, T = 8, 32, 64, 16, 6   # batch, input_shape, rnn_hidden_dim, n_actions, seq

    key = jax.random.PRNGKey(0)
    k_params, k_x, k_h, k_seq = jax.random.split(key, 4)

    raw = init_params(k_params, D_IN, H, A)
    inputs = jax.random.normal(k_x, (B, D_IN), jnp.float32)
    hidden = 0.1 * jax.random.normal(k_h, (B, H), jnp.float32)
    x_seq = jax.random.normal(k_seq, (T, B, D_IN), jnp.float32)

    q_ref, h_ref = reference_forward(inputs, hidden, raw)

    # ---- single step, f32 matmul operands (strict numerics check) ----
    packed_f32 = pack_params(raw, matmul_dtype=jnp.float32)
    q, h = rnn_agent_forward(inputs, hidden, packed_f32)
    q = jax.block_until_ready(q)
    h = jax.block_until_ready(h)
    assert q.shape == (B, A) and h.shape == (B, H)
    assert jnp.allclose(q, q_ref, atol=1e-5, rtol=1e-5)
    assert jnp.allclose(h, h_ref, atol=1e-5, rtol=1e-5)

    # ---- single step, bf16 matmul operands (default; MXU-native on v5e/v6e/v7x) ----
    packed_bf16 = pack_params(raw)
    q_b, h_b = rnn_agent_forward(inputs, hidden, packed_bf16)
    q_b = jax.block_until_ready(q_b)
    assert jnp.allclose(q_b, q_ref, atol=5e-2, rtol=5e-2)
    assert jnp.allclose(h_b, h_ref, atol=5e-2, rtol=5e-2)

    # ---- reference rollout ----
    h_r = hidden
    q_steps = []
    for t in range(T):
        q_t, h_r = reference_forward(x_seq[t], h_r, raw)
        q_steps.append(q_t)
    q_seq_ref = jnp.stack(q_steps)

    # ---- T-step rollout, f32 (strict) ----
    q_seq, h_T = rnn_agent_rollout(x_seq, hidden, packed_f32)
    q_seq = jax.block_until_ready(q_seq)
    h_T = jax.block_until_ready(h_T)
    assert q_seq.shape == (T, B, A) and h_T.shape == (B, H)
    assert jnp.allclose(q_seq, q_seq_ref, atol=1e-4, rtol=1e-4)
    assert jnp.allclose(h_T, h_r, atol=1e-4, rtol=1e-4)

    # ---- T-step rollout, bf16 (recurrent-error check requested in review) ----
    q_seq_b, h_T_b = rnn_agent_rollout(x_seq, hidden, packed_bf16)
    q_seq_b = jax.block_until_ready(q_seq_b)
    assert jnp.allclose(q_seq_b, q_seq_ref, atol=5e-2, rtol=5e-2)
    assert jnp.allclose(h_T_b, h_r, atol=5e-2, rtol=5e-2)

    print("KERNEL_OK")
</pallas_src>

<mosaic_0001>
module attributes {stable_mosaic.version = 11 : i64} {
  func.func @rnn_agent_kernel(%arg0: memref<8x128xf32, #tpu.memory_space<vmem>>, %arg1: memref<8x128xf32, #tpu.memory_space<vmem>>, %arg2: memref<128x128xf32, #tpu.memory_space<vmem>>, %arg3: memref<1x128xf32, #tpu.memory_space<vmem>>, %arg4: memref<256x512xf32, #tpu.memory_space<vmem>>, %arg5: memref<1x256xf32, #tpu.memory_space<vmem>>, %arg6: memref<1x128xf32, #tpu.memory_space<vmem>>, %arg7: memref<1x128xf32, #tpu.memory_space<vmem>>, %arg8: memref<128x128xf32, #tpu.memory_space<vmem>>, %arg9: memref<1x128xf32, #tpu.memory_space<vmem>>, %arg10: memref<8x128xf32, #tpu.memory_space<vmem>>, %arg11: memref<8x128xf32, #tpu.memory_space<vmem>>) attributes {dimension_semantics = [], scalar_prefetch = 0 : i64, scratch_operands = 0 : i64, tpu.core_type = #tpu.core_type<tc>} {
    %c0 = arith.constant 0 : index
    %c0_0 = arith.constant 0 : index
    %0 = vector.load %arg3[%c0, %c0_0] : memref<1x128xf32, #tpu.memory_space<vmem>>, vector<1x128xf32>
    %1 = vector.shape_cast %0 : vector<1x128xf32> to vector<1x128xf32>
    %2 = vector.broadcast %1 : vector<1x128xf32> to vector<8x128xf32>
    %c0_1 = arith.constant 0 : index
    %c0_2 = arith.constant 0 : index
    %3 = vector.load %arg5[%c0_1, %c0_2] : memref<1x256xf32, #tpu.memory_space<vmem>>, vector<1x256xf32>
    %4 = vector.shape_cast %3 : vector<1x256xf32> to vector<1x256xf32>
    %5 = vector.broadcast %4 : vector<1x256xf32> to vector<8x256xf32>
    %c0_3 = arith.constant 0 : index
    %c0_4 = arith.constant 0 : index
    %6 = vector.load %arg6[%c0_3, %c0_4] : memref<1x128xf32, #tpu.memory_space<vmem>>, vector<1x128xf32>
    %7 = vector.shape_cast %6 : vector<1x128xf32> to vector<1x128xf32>
    %8 = vector.broadcast %7 : vector<1x128xf32> to vector<8x128xf32>
    %c0_5 = arith.constant 0 : index
    %c0_6 = arith.constant 0 : index
    %9 = vector.load %arg7[%c0_5, %c0_6] : memref<1x128xf32, #tpu.memory_space<vmem>>, vector<1x128xf32>
    %10 = vector.shape_cast %9 : vector<1x128xf32> to vector<1x128xf32>
    %11 = vector.broadcast %10 : vector<1x128xf32> to vector<8x128xf32>
    %c0_7 = arith.constant 0 : index
    %c0_8 = arith.constant 0 : index
    %12 = vector.load %arg9[%c0_7, %c0_8] : memref<1x128xf32, #tpu.memory_space<vmem>>, vector<1x128xf32>
    %13 = vector.shape_cast %12 : vector<1x128xf32> to vector<1x128xf32>
    %14 = vector.broadcast %13 : vector<1x128xf32> to vector<8x128xf32>
    %c0_9 = arith.constant 0 : index
    %c0_10 = arith.constant 0 : index
    %15 = vector.load %arg0[%c0_9, %c0_10] : memref<8x128xf32, #tpu.memory_space<vmem>>, vector<8x128xf32>
    %c0_11 = arith.constant 0 : index
    %c0_12 = arith.constant 0 : index
    %16 = vector.load %arg1[%c0_11, %c0_12] : memref<8x128xf32, #tpu.memory_space<vmem>>, vector<8x128xf32>
    %c0_13 = arith.constant 0 : index
    %c0_14 = arith.constant 0 : index
    %17 = vector.load %arg2[%c0_13, %c0_14] : memref<128x128xf32, #tpu.memory_space<vmem>>, vector<128x128xf32>
    %c0_15 = arith.constant 0 : index
    %c0_16 = arith.constant 0 : index
    %18 = vector.load %arg4[%c0_15, %c0_16] : memref<256x512xf32, #tpu.memory_space<vmem>>, vector<256x512xf32>
    %c0_17 = arith.constant 0 : index
    %c0_18 = arith.constant 0 : index
    %19 = vector.load %arg8[%c0_17, %c0_18] : memref<128x128xf32, #tpu.memory_space<vmem>>, vector<128x128xf32>
    %cst = arith.constant dense<0.000000e+00> : vector<8x128xf32>
    %20 = tpu.matmul %15, %17, %cst {dimension_numbers = #tpu.dot_dimension_numbers<[1], [0], [0], [1], [0, 0, 1, 1], [], []>} : vector<8x128xf32>, vector<128x128xf32>, vector<8x128xf32> -> vector<8x128xf32>
    %21 = arith.addf %20, %2 : vector<8x128xf32>
    %cst_19 = arith.constant 0.000000e+00 : f32
    %22 = vector.broadcast %cst_19 : f32 to vector<8x128xf32>
    %23 = arith.maximumf %21, %22 : vector<8x128xf32>
    %24 = tpu.concatenate %23, %16 in 1 : vector<8x128xf32>, vector<8x128xf32> -> vector<8x256xf32>
    %cst_20 = arith.constant dense<0.000000e+00> : vector<8x512xf32>
    %25 = tpu.matmul %24, %18, %cst_20 {dimension_numbers = #tpu.dot_dimension_numbers<[1], [0], [0], [1], [0, 0, 1, 1], [], []>} : vector<8x256xf32>, vector<256x512xf32>, vector<8x512xf32> -> vector<8x512xf32>
    %26 = vector.extract_strided_slice %25 {offsets = [0, 0], sizes = [8, 256], strides = [1, 1]} : vector<8x512xf32> to vector<8x256xf32>
    %27 = arith.addf %26, %5 : vector<8x256xf32>
    %28 = arith.negf %27 : vector<8x256xf32>
    %29 = math.exp %28 : vector<8x256xf32>
    %cst_21 = arith.constant 1.000000e+00 : f32
    %30 = vector.broadcast %cst_21 : f32 to vector<8x256xf32>
    %31 = arith.addf %30, %29 : vector<8x256xf32>
    %32 = arith.divf %30, %31 : vector<8x256xf32>
    %33 = vector.extract_strided_slice %32 {offsets = [0, 0], sizes = [8, 128], strides = [1, 1]} : vector<8x256xf32> to vector<8x128xf32>
    %34 = vector.extract_strided_slice %32 {offsets = [0, 128], sizes = [8, 128], strides = [1, 1]} : vector<8x256xf32> to vector<8x128xf32>
    %35 = vector.extract_strided_slice %25 {offsets = [0, 256], sizes = [8, 128], strides = [1, 1]} : vector<8x512xf32> to vector<8x128xf32>
    %36 = arith.addf %35, %8 : vector<8x128xf32>
    %37 = vector.extract_strided_slice %25 {offsets = [0, 384], sizes = [8, 128], strides = [1, 1]} : vector<8x512xf32> to vector<8x128xf32>
    %38 = arith.addf %37, %11 : vector<8x128xf32>
    %39 = arith.mulf %33, %38 : vector<8x128xf32>
    %40 = arith.addf %36, %39 : vector<8x128xf32>
    %41 = math.tanh %40 : vector<8x128xf32>
    %cst_22 = arith.constant 1.000000e+00 : f32
    %42 = vector.broadcast %cst_22 : f32 to vector<8x128xf32>
    %43 = arith.subf %42, %34 : vector<8x128xf32>
    %44 = arith.mulf %43, %41 : vector<8x128xf32>
    %45 = arith.mulf %34, %16 : vector<8x128xf32>
    %46 = arith.addf %44, %45 : vector<8x128xf32>
    %cst_23 = arith.constant dense<0.000000e+00> : vector<8x128xf32>
    %47 = tpu.matmul %46, %19, %cst_23 {dimension_numbers = #tpu.dot_dimension_numbers<[1], [0], [0], [1], [0, 0, 1, 1], [], []>} : vector<8x128xf32>, vector<128x128xf32>, vector<8x128xf32> -> vector<8x128xf32>
    %48 = arith.addf %47, %14 : vector<8x128xf32>
    %c0_24 = arith.constant 0 : index
    %c0_25 = arith.constant 0 : index
    %49 = vector.load %arg10[%c0_24, %c0_25] : memref<8x128xf32, #tpu.memory_space<vmem>>, vector<8x128xf32>
    tpu.vector_store %arg10[%c0_24, %c0_25], %48 {strides = array<i32>} : memref<8x128xf32, #tpu.memory_space<vmem>>, vector<8x128xf32>,
    %c0_26 = arith.constant 0 : index
    %c0_27 = arith.constant 0 : index
    %50 = vector.load %arg11[%c0_26, %c0_27] : memref<8x128xf32, #tpu.memory_space<vmem>>, vector<8x128xf32>
    tpu.vector_store %arg11[%c0_26, %c0_27], %46 {strides = array<i32>} : memref<8x128xf32, #tpu.memory_space<vmem>>, vector<8x128xf32>,
    return
  }
}

</mosaic_0001>

<llo_original>
// kernel: tpu_custom_call.1
$region0: #{tpu_custom_call.1}
  #allocation0 [shape = 'u32[]', space=smem, size = 0x4, offset = 0x4, fixed_abs, tag = 'smem constant byte address 0x4 - core index']
  #allocation1 [shape = 'u32[144,128]{1,0:T(1,128)}', space=vmem, size = 0x12000, scoped, tag = 'internal scratch']
  %s0 = inlined_call_operand.hbm [shape: f32[8,128], index: 0, kind: input, shape index: {}]
  %s1 = inlined_call_operand.hbm [shape: f32[8,128], index: 1, kind: input, shape index: {}]
  %s2 = inlined_call_operand.hbm [shape: f32[128,128], index: 2, kind: input, shape index: {}]
  %s3 = inlined_call_operand.vmem [shape: f32[1,128], index: 3, kind: input, shape index: {}]
  %s4 = inlined_call_operand.hbm [shape: f32[256,512], index: 4, kind: input, shape index: {}]
  %s5 = inlined_call_operand.vmem [shape: f32[1,256], index: 5, kind: input, shape index: {}]
  %s6 = inlined_call_operand.vmem [shape: f32[1,128], index: 6, kind: input, shape index: {}]
  %s7 = inlined_call_operand.vmem [shape: f32[1,128], index: 7, kind: input, shape index: {}]
  %s8 = inlined_call_operand.hbm [shape: f32[128,128], index: 8, kind: input, shape index: {}]
  %s9 = inlined_call_operand.vmem [shape: f32[1,128], index: 9, kind: input, shape index: {}]
  %s10 = inlined_call_operand.hbm [shape: f32[8,128], index: 10, kind: output, shape index: {0}]
  %s11 = inlined_call_operand.hbm [shape: f32[8,128], index: 11, kind: output, shape index: {1}]
  %12 = xla_tuple %s10, %s11
  %s13 = sld [smem:[#allocation0]]
  $region78: #{tpu_custom_call.1} parent=0
    _
  %s15 = ssub.s32 1, %s13
  %s16 = scalar_select 0, %s15, %s13
  $region1: #{tpu_custom_call.1} parent=0
    #allocation2 [shape = 'u8[4096]{0}', space=vmem, size = 0x1000, scoped, tag = 'input window, operand 0, single buffered']
    #allocation3 [shape = 's32[1]{0}', space=sflag, size = 0x4, scoped, tag = 'scoped memory for tpu_custom_call.1']
    #allocation4 [shape = 's32[1]{0}', space=sflag, size = 0x4, scoped, tag = 'scoped memory for tpu_custom_call.1']
    #allocation5 [shape = 'u8[4096]{0}', space=vmem, size = 0x1000, scoped, tag = 'input window, operand 1, single buffered']
    #allocation6 [shape = 's32[1]{0}', space=sflag, size = 0x4, scoped, tag = 'scoped memory for tpu_custom_call.1']
    #allocation7 [shape = 'u8[65536]{0}', space=vmem, size = 0x10000, scoped, tag = 'input window, operand 2, single buffered']
    #allocation8 [shape = 'u8[524288]{0}', space=vmem, size = 0x80000, scoped, tag = 'input window, operand 4, single buffered']
    #allocation9 [shape = 's32[1]{0}', space=sflag, size = 0x4, scoped, tag = 'scoped memory for tpu_custom_call.1']
    #allocation10 [shape = 'u8[65536]{0}', space=vmem, size = 0x10000, scoped, tag = 'input window, operand 8, single buffered']
    #allocation11 [shape = 'u8[4096]{0}', space=vmem, size = 0x1000, scoped, tag = 'output window, operand 0, single buffered']
    #allocation12 [shape = 'u8[4096]{0}', space=vmem, size = 0x1000, scoped, tag = 'output window, operand 1, single buffered']
    #allocation13 [shape = 's32[1]{0}', space=sflag, size = 0x4, scoped, tag = 'scoped memory for tpu_custom_call.1']
    %17 = vsyncpa [#allocation3], 0
    %18 = vsyncpa [#allocation6], 0
    %19 = vsyncpa [#allocation9], 0
    %20 = vsyncpa [#allocation4], 0
    %21 = vsyncpa [#allocation13], 0
    // Predicated region
    $region2: #{tpu_custom_call.1} parent=1 // pred_check
      _
    $region3: #{tpu_custom_call.1} parent=1 // pred_check_branch
      %23 = sbr.rel (0) target = $region5
    $region4: #{tpu_custom_call.1} parent=1 // pred_region
      %s25 = ssub.s32 128, 128
      %26 = vsyncadd [#allocation3], %s25
      %s28 = sshll.u32 [#allocation2], 4
      %s29 = int_to_ptr.vmem [resolvable:$true] %s28
      %31 = dma.hbm_to_vmem [thread:$0]  %s0, 128, %s29, [#allocation3]
    $region5: #{tpu_custom_call.1} parent=1 // pred_fallthru
      _
    // Predicated region
    $region6: #{tpu_custom_call.1} parent=1 // pred_check
      _
    $region7: #{tpu_custom_call.1} parent=1 // pred_check_branch
      %33 = sbr.rel (0) target = $region9
    $region8: #{tpu_custom_call.1} parent=1 // pred_region
      %s35 = ssub.s32 128, 128
      %36 = vsyncadd [#allocation6], %s35
      %s38 = sshll.u32 [#allocation5], 4
      %s39 = int_to_ptr.vmem [resolvable:$true] %s38
      %41 = dma.hbm_to_vmem [thread:$0]  %s1, 128, %s39, [#allocation6]
    $region9: #{tpu_custom_call.1} parent=1 // pred_fallthru
      _
    // Predicated region
    $region10: #{tpu_custom_call.1} parent=1 // pred_check
      _
    $region11: #{tpu_custom_call.1} parent=1 // pred_check_branch
      %43 = sbr.rel (0) target = $region13
    $region12: #{tpu_custom_call.1} parent=1 // pred_region
      %s45 = ssub.s32 2048, 2048
      %46 = vsyncadd [#allocation6], %s45
      %s47 = sshll.u32 [#allocation7], 4
      %s48 = int_to_ptr.vmem [resolvable:$true] %s47
      %53 = dma.hbm_to_vmem [thread:$0]  %s2, 2048, %s48, [#allocation6], 128, 128, 8
    $region13: #{tpu_custom_call.1} parent=1 // pred_fallthru
      _
    // Predicated region
    $region14: #{tpu_custom_call.1} parent=1 // pred_check
      _
    $region15: #{tpu_custom_call.1} parent=1 // pred_check_branch
      %55 = sbr.rel (0) target = $region17
    $region16: #{tpu_custom_call.1} parent=1 // pred_region
      _
    $region17: #{tpu_custom_call.1} parent=1 // pred_fallthru
      _
    // Predicated region
    $region18: #{tpu_custom_call.1} parent=1 // pred_check
      _
    $region19: #{tpu_custom_call.1} parent=1 // pred_check_branch
      %57 = sbr.rel (0) target = $region21
    $region20: #{tpu_custom_call.1} parent=1 // pred_region
      %s59 = ssub.s32 16384, 16384
      %60 = vsyncadd [#allocation9], %s59
      %s61 = sshll.u32 [#allocation8], 4
      %s62 = int_to_ptr.vmem [resolvable:$true] %s61
      %67 = dma.hbm_to_vmem [thread:$0]  %s4, 16384, %s62, [#allocation9], 512, 512, 32
    $region21: #{tpu_custom_call.1} parent=1 // pred_fallthru
      _
    // Predicated region
    $region22: #{tpu_custom_call.1} parent=1 // pred_check
      _
    $region23: #{tpu_custom_call.1} parent=1 // pred_check_branch
      %69 = sbr.rel (0) target = $region25
    $region24: #{tpu_custom_call.1} parent=1 // pred_region
      _
    $region25: #{tpu_custom_call.1} parent=1 // pred_fallthru
      _
    // Predicated region
    $region26: #{tpu_custom_call.1} parent=1 // pred_check
      _
    $region27: #{tpu_custom_call.1} parent=1 // pred_check_branch
      %71 = sbr.rel (0) target = $region29
    $region28: #{tpu_custom_call.1} parent=1 // pred_region
      _
    $region29: #{tpu_custom_call.1} parent=1 // pred_fallthru
      _
    // Predicated region
    $region30: #{tpu_custom_call.1} parent=1 // pred_check
      _
    $region31: #{tpu_custom_call.1} parent=1 // pred_check_branch
      %73 = sbr.rel (0) target = $region33
    $region32: #{tpu_custom_call.1} parent=1 // pred_region
      _
    $region33: #{tpu_custom_call.1} parent=1 // pred_fallthru
      _
    // Predicated region
    $region34: #{tpu_custom_call.1} parent=1 // pred_check
      _
    $region35: #{tpu_custom_call.1} parent=1 // pred_check_branch
      %75 = sbr.rel (0) target = $region37
    $region36: #{tpu_custom_call.1} parent=1 // pred_region
      %s77 = ssub.s32 2048, 2048
      %78 = vsyncadd [#allocation9], %s77
      %s79 = sshll.u32 [#allocation10], 4
      %s80 = int_to_ptr.vmem [resolvable:$true] %s79
      %85 = dma.hbm_to_vmem [thread:$0]  %s8, 2048, %s80, [#allocation9], 128, 128, 8
    $region37: #{tpu_custom_call.1} parent=1 // pred_fallthru
      _
    // Predicated region
    $region38: #{tpu_custom_call.1} parent=1 // pred_check
      _
    $region39: #{tpu_custom_call.1} parent=1 // pred_check_branch
      %87 = sbr.rel (0) target = $region41
    $region40: #{tpu_custom_call.1} parent=1 // pred_region
      _
    $region41: #{tpu_custom_call.1} parent=1 // pred_fallthru
      _
    // Predicated region
    $region42: #{tpu_custom_call.1} parent=1 // pred_check
      _
    $region43: #{tpu_custom_call.1} parent=1 // pred_check_branch
      %89 = sbr.rel (0) target = $region45
    $region44: #{tpu_custom_call.1} parent=1 // pred_region
      %90 = dma.done [#allocation3], 128
    $region45: #{tpu_custom_call.1} parent=1 // pred_fallthru
      _
    // Predicated region
    $region46: #{tpu_custom_call.1} parent=1 // pred_check
      _
    $region47: #{tpu_custom_call.1} parent=1 // pred_check_branch
      %92 = sbr.rel (0) target = $region49
    $region48: #{tpu_custom_call.1} parent=1 // pred_region
      %93 = dma.done [#allocation6], 128
    $region49: #{tpu_custom_call.1} parent=1 // pred_fallthru
      _
    // Predicated region
    $region50: #{tpu_custom_call.1} parent=1 // pred_check
      _
    $region51: #{tpu_custom_call.1} parent=1 // pred_check_branch
      %95 = sbr.rel (0) target = $region53
    $region52: #{tpu_custom_call.1} parent=1 // pred_region
      %96 = dma.done [#allocation6], 2048
    $region53: #{tpu_custom_call.1} parent=1 // pred_fallthru
      _
    // Predicated region
    $region54: #{tpu_custom_call.1} parent=1 // pred_check
      _
    $region55: #{tpu_custom_call.1} parent=1 // pred_check_branch
      %98 = sbr.rel (0) target = $region57
    $region56: #{tpu_custom_call.1} parent=1 // pred_region
      %99 = dma.done [#allocation9], 16384
    $region57: #{tpu_custom_call.1} parent=1 // pred_fallthru
      _
    // Predicated region
    $region58: #{tpu_custom_call.1} parent=1 // pred_check
      _
    $region59: #{tpu_custom_call.1} parent=1 // pred_check_branch
      %101 = sbr.rel (0) target = $region61
    $region60: #{tpu_custom_call.1} parent=1 // pred_region
      %102 = dma.done [#allocation9], 2048
    $region61: #{tpu_custom_call.1} parent=1 // pred_fallthru
      _
    %v103 = vld [vmem:[%s3] sm:$0x1]
    %v105 = vlaneseq
    %v106 = vshrl.u32 %v105, 7
    %v107 = vsub.s32 0, %v106
    %v108 = vrot.slane %v103, %v107
    %v110 = vld [vmem:[%s5] sm:$0x3]
    %v112 = vlaneseq
    %v113 = vshrl.u32 %v112, 7
    %v114 = vsub.s32 0, %v113
    %v115 = vrot.slane %v110, %v114
    %v116 = vlaneseq
    %v117 = vshrl.u32 %v116, 7
    %v118 = vsub.s32 1, %v117
    %v119 = vrot.slane %v110, %v118
    %v122 = vld [vmem:[%s6] sm:$0x1]
    %v124 = vlaneseq
    %v125 = vshrl.u32 %v124, 7
    %v126 = vsub.s32 0, %v125
    %v127 = vrot.slane %v122, %v126
    %v129 = vld [vmem:[%s7] sm:$0x1]
    %v131 = vlaneseq
    %v132 = vshrl.u32 %v131, 7
    %v133 = vsub.s32 0, %v132
    %v134 = vrot.slane %v129, %v133
    %v136 = vld [vmem:[%s9] sm:$0x1]
    %v138 = vlaneseq
    %v139 = vshrl.u32 %v138, 7
    %v140 = vsub.s32 0, %v139
    %v141 = vrot.slane %v136, %v140
    %v143 = vld [vmem:[#allocation2] sm:$0xff]
    %v144 = vld [vmem:[#allocation5] sm:$0xff]
    %v145 = vld [vmem:[#allocation7] sm:$0xff]
    %v146 = vld [vmem:[#allocation7 + $0x8] sm:$0xff]
    %v147 = vld [vmem:[#allocation7 + $0x10] sm:$0xff]
    %v148 = vld [vmem:[#allocation7 + $0x18] sm:$0xff]
    %v149 = vld [vmem:[#allocation7 + $0x20] sm:$0xff]
    %v150 = vld [vmem:[#allocation7 + $0x28] sm:$0xff]
    %v151 = vld [vmem:[#allocation7 + $0x30] sm:$0xff]
    %v152 = vld [vmem:[#allocation7 + $0x38] sm:$0xff]
    %v153 = vld [vmem:[#allocation7 + $0x40] sm:$0xff]
    %v154 = vld [vmem:[#allocation7 + $0x48] sm:$0xff]
    %v155 = vld [vmem:[#allocation7 + $0x50] sm:$0xff]
    %v156 = vld [vmem:[#allocation7 + $0x58] sm:$0xff]
    %v157 = vld [vmem:[#allocation7 + $0x60] sm:$0xff]
    %v158 = vld [vmem:[#allocation7 + $0x68] sm:$0xff]
    %v159 = vld [vmem:[#allocation7 + $0x70] sm:$0xff]
    %v160 = vld [vmem:[#allocation7 + $0x78] sm:$0xff]
    %v161 = vld [vmem:[#allocation8] sm:$0xff]
    %v162 = vld [vmem:[#allocation8 + $0x8] sm:$0xff]
    %v163 = vld [vmem:[#allocation8 + $0x10] sm:$0xff]
    %v164 = vld [vmem:[#allocation8 + $0x18] sm:$0xff]
    %v165 = vld [vmem:[#allocation8 + $0x20] sm:$0xff]
    %v166 = vld [vmem:[#allocation8 + $0x28] sm:$0xff]
    %v167 = vld [vmem:[#allocation8 + $0x30] sm:$0xff]
    %v168 = vld [vmem:[#allocation8 + $0x38] sm:$0xff]
    %v169 = vld [vmem:[#allocation8 + $0x40] sm:$0xff]
    %v170 = vld [vmem:[#allocation8 + $0x48] sm:$0xff]
    %v171 = vld [vmem:[#allocation8 + $0x50] sm:$0xff]
    %v172 = vld [vmem:[#allocation8 + $0x58] sm:$0xff]
    %v173 = vld [vmem:[#allocation8 + $0x60] sm:$0xff]
    %v174 = vld [vmem:[#allocation8 + $0x68] sm:$0xff]
    %v175 = vld [vmem:[#allocation8 + $0x70] sm:$0xff]
    %v176 = vld [vmem:[#allocation8 + $0x78] sm:$0xff]
    %v177 = vld [vmem:[#allocation8 + $0x80] sm:$0xff]
    %v178 = vld [vmem:[#allocation8 + $0x88] sm:$0xff]
    %v179 = vld [vmem:[#allocation8 + $0x90] sm:$0xff]
    %v180 = vld [vmem:[#allocation8 + $0x98] sm:$0xff]
    %v181 = vld [vmem:[#allocation8 + $0xa0] sm:$0xff]
    %v182 = vld [vmem:[#allocation8 + $0xa8] sm:$0xff]
    %v183 = vld [vmem:[#allocation8 + $0xb0] sm:$0xff]
    %v184 = vld [vmem:[#allocation8 + $0xb8] sm:$0xff]
    %v185 = vld [vmem:[#allocation8 + $0xc0] sm:$0xff]
    %v186 = vld [vmem:[#allocation8 + $0xc8] sm:$0xff]
    %v187 = vld [vmem:[#allocation8 + $0xd0] sm:$0xff]
    %v188 = vld [vmem:[#allocation8 + $0xd8] sm:$0xff]
    %v189 = vld [vmem:[#allocation8 + $0xe0] sm:$0xff]
    %v190 = vld [vmem:[#allocation8 + $0xe8] sm:$0xff]
    %v191 = vld [vmem:[#allocation8 + $0xf0] sm:$0xff]
    %v192 = vld [vmem:[#allocation8 + $0xf8] sm:$0xff]
    %v193 = vld [vmem:[#allocation8 + $0x100] sm:$0xff]
    %v194 = vld [vmem:[#allocation8 + $0x108] sm:$0xff]
    %v195 = vld [vmem:[#allocation8 + $0x110] sm:$0xff]
    %v196 = vld [vmem:[#allocation8 + $0x118] sm:$0xff]
    %v197 = vld [vmem:[#allocation8 + $0x120] sm:$0xff]
    %v198 = vld [vmem:[#allocation8 + $0x128] sm:$0xff]
    %v199 = vld [vmem:[#allocation8 + $0x130] sm:$0xff]
    %v200 = vld [vmem:[#allocation8 + $0x138] sm:$0xff]
    %v201 = vld [vmem:[#allocation8 + $0x140] sm:$0xff]
    %v202 = vld [vmem:[#allocation8 + $0x148] sm:$0xff]
    %v203 = vld [vmem:[#allocation8 + $0x150] sm:$0xff]
    %v204 = vld [vmem:[#allocation8 + $0x158] sm:$0xff]
    %v205 = vld [vmem:[#allocation8 + $0x160] sm:$0xff]
    %v206 = vld [vmem:[#allocation8 + $0x168] sm:$0xff]
    %v207 = vld [vmem:[#allocation8 + $0x170] sm:$0xff]
    %v208 = vld [vmem:[#allocation8 + $0x178] sm:$0xff]
    %v209 = vld [vmem:[#allocation8 + $0x180] sm:$0xff]
    %v210 = vld [vmem:[#allocation8 + $0x188] sm:$0xff]
    %v211 = vld [vmem:[#allocation8 + $0x190] sm:$0xff]
    %v212 = vld [vmem:[#allocation8 + $0x198] sm:$0xff]
    %v213 = vld [vmem:[#allocation8 + $0x1a0] sm:$0xff]
    %v214 = vld [vmem:[#allocation8 + $0x1a8] sm:$0xff]
    %v215 = vld [vmem:[#allocation8 + $0x1b0] sm:$0xff]
    %v216 = vld [vmem:[#allocation8 + $0x1b8] sm:$0xff]
    %v217 = vld [vmem:[#allocation8 + $0x1c0] sm:$0xff]
    %v218 = vld [vmem:[#allocation8 + $0x1c8] sm:$0xff]
    %v219 = vld [vmem:[#allocation8 + $0x1d0] sm:$0xff]
    %v220 = vld [vmem:[#allocation8 + $0x1d8] sm:$0xff]
    %v221 = vld [vmem:[#allocation8 + $0x1e0] sm:$0xff]
    %v222 = vld [vmem:[#allocation8 + $0x1e8] sm:$0xff]
    %v223 = vld [vmem:[#allocation8 + $0x1f0] sm:$0xff]
    %v224 = vld [vmem:[#allocation8 + $0x1f8] sm:$0xff]
    %v225 = vld [vmem:[#allocation8 + $0x200] sm:$0xff]
    %v226 = vld [vmem:[#allocation8 + $0x208] sm:$0xff]
    %v227 = vld [vmem:[#allocation8 + $0x210] sm:$0xff]
    %v228 = vld [vmem:[#allocation8 + $0x218] sm:$0xff]
    %v229 = vld [vmem:[#allocation8 + $0x220] sm:$0xff]
    %v230 = vld [vmem:[#allocation8 + $0x228] sm:$0xff]
    %v231 = vld [vmem:[#allocation8 + $0x230] sm:$0xff]
    %v232 = vld [vmem:[#allocation8 + $0x238] sm:$0xff]
    %v233 = vld [vmem:[#allocation8 + $0x240] sm:$0xff]
    %v234 = vld [vmem:[#allocation8 + $0x248] sm:$0xff]
    %v235 = vld [vmem:[#allocation8 + $0x250] sm:$0xff]
    %v236 = vld [vmem:[#allocation8 + $0x258] sm:$0xff]
    %v237 = vld [vmem:[#allocation8 + $0x260] sm:$0xff]
    %v238 = vld [vmem:[#allocation8 + $0x268] sm:$0xff]
    %v239 = vld [vmem:[#allocation8 + $0x270] sm:$0xff]
    %v240 = vld [vmem:[#allocation8 + $0x278] sm:$0xff]
    %v241 = vld [vmem:[#allocation8 + $0x280] sm:$0xff]
    %v242 = vld [vmem:[#allocation8 + $0x288] sm:$0xff]
    %v243 = vld [vmem:[#allocation8 + $0x290] sm:$0xff]
    %v244 = vld [vmem:[#allocation8 + $0x298] sm:$0xff]
    %v245 = vld [vmem:[#allocation8 + $0x2a0] sm:$0xff]
    %v246 = vld [vmem:[#allocation8 + $0x2a8] sm:$0xff]
    %v247 = vld [vmem:[#allocation8 + $0x2b0] sm:$0xff]
    %v248 = vld [vmem:[#allocation8 + $0x2b8] sm:$0xff]
    %v249 = vld [vmem:[#allocation8 + $0x2c0] sm:$0xff]
    %v250 = vld [vmem:[#allocation8 + $0x2c8] sm:$0xff]
    %v251 = vld [vmem:[#allocation8 + $0x2d0] sm:$0xff]
    %v252 = vld [vmem:[#allocation8 + $0x2d8] sm:$0xff]
    %v253 = vld [vmem:[#allocation8 + $0x2e0] sm:$0xff]
    %v254 = vld [vmem:[#allocation8 + $0x2e8] sm:$0xff]
    %v255 = vld [vmem:[#allocation8 + $0x2f0] sm:$0xff]
    %v256 = vld [vmem:[#allocation8 + $0x2f8] sm:$0xff]
    %v257 = vld [vmem:[#allocation8 + $0x300] sm:$0xff]
    %v258 = vld [vmem:[#allocation8 + $0x308] sm:$0xff]
    %v259 = vld [vmem:[#allocation8 + $0x310] sm:$0xff]
    %v260 = vld [vmem:[#allocation8 + $0x318] sm:$0xff]
    %v261 = vld [vmem:[#allocation8 + $0x320] sm:$0xff]
    %v262 = vld [vmem:[#allocation8 + $0x328] sm:$0xff]
    %v263 = vld [vmem:[#allocation8 + $0x330] sm:$0xff]
    %v264 = vld [vmem:[#allocation8 + $0x338] sm:$0xff]
    %v265 = vld [vmem:[#allocation8 + $0x340] sm:$0xff]
    %v266 = vld [vmem:[#allocation8 + $0x348] sm:$0xff]
    %v267 = vld [vmem:[#allocation8 + $0x350] sm:$0xff]
    %v268 = vld [vmem:[#allocation8 + $0x358] sm:$0xff]
    %v269 = vld [vmem:[#allocation8 + $0x360] sm:$0xff]
    %v270 = vld [vmem:[#allocation8 + $0x368] sm:$0xff]
    %v271 = vld [vmem:[#allocation8 + $0x370] sm:$0xff]
    %v272 = vld [vmem:[#allocation8 + $0x378] sm:$0xff]
    %v273 = vld [vmem:[#allocation8 + $0x380] sm:$0xff]
    %v274 = vld [vmem:[#allocation8 + $0x388] sm:$0xff]
    %v275 = vld [vmem:[#allocation8 + $0x390] sm:$0xff]
    %v276 = vld [vmem:[#allocation8 + $0x398] sm:$0xff]
    %v277 = vld [vmem:[#allocation8 + $0x3a0] sm:$0xff]
    %v278 = vld [vmem:[#allocation8 + $0x3a8] sm:$0xff]
    %v279 = vld [vmem:[#allocation8 + $0x3b0] sm:$0xff]
    %v280 = vld [vmem:[#allocation8 + $0x3b8] sm:$0xff]
    %v281 = vld [vmem:[#allocation8 + $0x3c0] sm:$0xff]
    %v282 = vld [vmem:[#allocation8 + $0x3c8] sm:$0xff]
    %v283 = vld [vmem:[#allocation8 + $0x3d0] sm:$0xff]
    %v284 = vld [vmem:[#allocation8 + $0x3d8] sm:$0xff]
    %v285 = vld [vmem:[#allocation8 + $0x3e0] sm:$0xff]
    %v286 = vld [vmem:[#allocation8 + $0x3e8] sm:$0xff]
    %v287 = vld [vmem:[#allocation8 + $0x3f0] sm:$0xff]
    %v288 = vld [vmem:[#allocation8 + $0x3f8] sm:$0xff]
    %v289 = vld [vmem:[#allocation10] sm:$0xff]
    %v290 = vld [vmem:[#allocation10 + $0x8] sm:$0xff]
    %v291 = vld [vmem:[#allocation10 + $0x10] sm:$0xff]
    %v292 = vld [vmem:[#allocation10 + $0x18] sm:$0xff]
    %v293 = vld [vmem:[#allocation10 + $0x20] sm:$0xff]
    %v294 = vld [vmem:[#allocation10 + $0x28] sm:$0xff]
    %v295 = vld [vmem:[#allocation10 + $0x30] sm:$0xff]
    %v296 = vld [vmem:[#allocation10 + $0x38] sm:$0xff]
    %v297 = vld [vmem:[#allocation10 + $0x40] sm:$0xff]
    %v298 = vld [vmem:[#allocation10 + $0x48] sm:$0xff]
    %v299 = vld [vmem:[#allocation10 + $0x50] sm:$0xff]
    %v300 = vld [vmem:[#allocation10 + $0x58] sm:$0xff]
    %v301 = vld [vmem:[#allocation10 + $0x60] sm:$0xff]
    %v302 = vld [vmem:[#allocation10 + $0x68] sm:$0xff]
    %v303 = vld [vmem:[#allocation10 + $0x70] sm:$0xff]
    %v304 = vld [vmem:[#allocation10 + $0x78] sm:$0xff]
    %305 = vmatprep.subr.mxu0 0.0
    %306 = vmatpush1.msra.mxu0 %v160
    %307 = vmatprep.subr.mxu0 0.0
    %308 = vmatpush1.msra.mxu0 %v159
    %309 = vmatprep.subr.mxu0 0.0
    %310 = vmatpush1.msra.mxu0 %v158
    %311 = vmatprep.subr.mxu0 0.0
    %312 = vmatpush1.msra.mxu0 %v157
    %313 = vmatprep.subr.mxu0 0.0
    %314 = vmatpush1.msra.mxu0 %v156
    %315 = vmatprep.subr.mxu0 0.0
    %316 = vmatpush1.msra.mxu0 %v155
    %317 = vmatprep.subr.mxu0 0.0
    %318 = vmatpush1.msra.mxu0 %v154
    %319 = vmatprep.subr.mxu0 0.0
    %320 = vmatpush1.msra.mxu0 %v153
    %321 = vmatprep.subr.mxu0 0.0
    %322 = vmatpush1.msra.mxu0 %v152
    %323 = vmatprep.subr.mxu0 0.0
    %324 = vmatpush1.msra.mxu0 %v151
    %325 = vmatprep.subr.mxu0 0.0
    %326 = vmatpush1.msra.mxu0 %v150
    %327 = vmatprep.subr.mxu0 0.0
    %328 = vmatpush1.msra.mxu0 %v149
    %329 = vmatprep.subr.mxu0 0.0
    %330 = vmatpush1.msra.mxu0 %v148
    %331 = vmatprep.subr.mxu0 0.0
    %332 = vmatpush1.msra.mxu0 %v147
    %333 = vmatprep.subr.mxu0 0.0
    %334 = vmatpush1.msra.mxu0 %v146
    %335 = vmatprep.subr.mxu0 0.0
    %336 = vmatpush1.msra.mxu0 %v145
    %337 = vmatprep.subr.mxu0 0.0
    %338 = vmatpush2.msra.mxu0 0.0
    %339 = vmatprep.subr.mxu0 0.0
    %340 = vmatpush2.msra.mxu0 0.0
    %341 = vmatprep.subr.mxu0 0.0
    %342 = vmatpush2.msra.mxu0 0.0
    %343 = vmatprep.subr.mxu0 0.0
    %344 = vmatpush2.msra.mxu0 0.0
    %345 = vmatprep.subr.mxu0 0.0
    %346 = vmatpush2.msra.mxu0 0.0
    %347 = vmatprep.subr.mxu0 0.0
    %348 = vmatpush2.msra.mxu0 0.0
    %349 = vmatprep.subr.mxu0 0.0
    %350 = vmatpush2.msra.mxu0 0.0
    %351 = vmatprep.subr.mxu0 0.0
    %352 = vmatpush2.msra.mxu0 0.0
    %353 = vmatprep.subr.mxu0 0.0
    %354 = vmatpush2.msra.mxu0 0.0
    %355 = vmatprep.subr.mxu0 0.0
    %356 = vmatpush2.msra.mxu0 0.0
    %357 = vmatprep.subr.mxu0 0.0
    %358 = vmatpush2.msra.mxu0 0.0
    %359 = vmatprep.subr.mxu0 0.0
    %360 = vmatpush2.msra.mxu0 0.0
    %361 = vmatprep.subr.mxu0 0.0
    %362 = vmatpush2.msra.mxu0 0.0
    %363 = vmatprep.subr.mxu0 0.0
    %364 = vmatpush2.msra.mxu0 0.0
    %365 = vmatprep.subr.mxu0 0.0
    %366 = vmatpush2.msra.mxu0 0.0
    %367 = vmatprep.subr.mxu0 0.0
    %368 = vmatpush2.msra.mxu0 0.0
    %369 = vmatprep.mubr.f32.mxu0 0.0
    %370 = vmatmul.mubr.f32.gmra.mxu0 %v143
    %v371 = vpop.f32.mrf.mxu0
    %v372 = vadd.f32 %v108, %v371
    %v373 = vpop.f32.mrf.mxu0
    %374 = vdwg.mxu0
    %v375 = vmax.f32 %v372, 0.0
    %376 = vmatprep.subr.mxu0 %v222
    %377 = vmatpush1.msra.mxu0 %v221
    %378 = vmatprep.subr.mxu0 %v218
    %379 = vmatpush1.msra.mxu0 %v217
    %380 = vmatprep.subr.mxu0 %v214
    %381 = vmatpush1.msra.mxu0 %v213
    %382 = vmatprep.subr.mxu0 %v210
    %383 = vmatpush1.msra.mxu0 %v209
    %384 = vmatprep.subr.mxu0 %v206
    %385 = vmatpush1.msra.mxu0 %v205
    %386 = vmatprep.subr.mxu0 %v202
    %387 = vmatpush1.msra.mxu0 %v201
    %388 = vmatprep.subr.mxu0 %v198
    %389 = vmatpush1.msra.mxu0 %v197
    %390 = vmatprep.subr.mxu0 %v194
    %391 = vmatpush1.msra.mxu0 %v193
    %392 = vmatprep.subr.mxu0 %v190
    %393 = vmatpush1.msra.mxu0 %v189
    %394 = vmatprep.subr.mxu0 %v186
    %395 = vmatpush1.msra.mxu0 %v185
    %396 = vmatprep.subr.mxu0 %v182
    %397 = vmatpush1.msra.mxu0 %v181
    %398 = vmatprep.subr.mxu0 %v178
    %399 = vmatpush1.msra.mxu0 %v177
    %400 = vmatprep.subr.mxu0 %v174
    %401 = vmatpush1.msra.mxu0 %v173
    %402 = vmatprep.subr.mxu0 %v170
    %403 = vmatpush1.msra.mxu0 %v169
    %404 = vmatprep.subr.mxu0 %v166
    %405 = vmatpush1.msra.mxu0 %v165
    %406 = vmatprep.subr.mxu0 %v162
    %407 = vmatpush1.msra.mxu0 %v161
    %408 = vmatprep.subr.mxu0 %v286
    %409 = vmatpush2.msra.mxu0 %v285
    %410 = vmatprep.subr.mxu0 %v282
    %411 = vmatpush2.msra.mxu0 %v281
    %412 = vmatprep.subr.mxu0 %v278
    %413 = vmatpush2.msra.mxu0 %v277
    %414 = vmatprep.subr.mxu0 %v274
    %415 = vmatpush2.msra.mxu0 %v273
    %416 = vmatprep.subr.mxu0 %v270
    %417 = vmatpush2.msra.mxu0 %v269
    %418 = vmatprep.subr.mxu0 %v266
    %419 = vmatpush2.msra.mxu0 %v265
    %420 = vmatprep.subr.mxu0 %v262
    %421 = vmatpush2.msra.mxu0 %v261
    %422 = vmatprep.subr.mxu0 %v258
    %423 = vmatpush2.msra.mxu0 %v257
    %424 = vmatprep.subr.mxu0 %v254
    %425 = vmatpush2.msra.mxu0 %v253
    %426 = vmatprep.subr.mxu0 %v250
    %427 = vmatpush2.msra.mxu0 %v249
    %428 = vmatprep.subr.mxu0 %v246
    %429 = vmatpush2.msra.mxu0 %v245
    %430 = vmatprep.subr.mxu0 %v242
    %431 = vmatpush2.msra.mxu0 %v241
    %432 = vmatprep.subr.mxu0 %v238
    %433 = vmatpush2.msra.mxu0 %v237
    %434 = vmatprep.subr.mxu0 %v234
    %435 = vmatpush2.msra.mxu0 %v233
    %436 = vmatprep.subr.mxu0 %v230
    %437 = vmatpush2.msra.mxu0 %v229
    %438 = vmatprep.subr.mxu0 %v226
    %439 = vmatpush2.msra.mxu0 %v225
    %440 = vmatprep.mubr.f32.mxu0 %v144
    %441 = vmatmul.mubr.f32.gmra.mxu0 %v375
    %v442 = vpop.f32.mrf.mxu0
    %v443 = vadd.f32 0.0, %v442
    %v444 = vpop.f32.mrf.mxu0
    %v445 = vadd.f32 0.0, %v444
    %446 = vdwg.mxu0
    %447 = vmatprep.subr.mxu0 %v224
    %448 = vmatpush1.msra.mxu0 %v223
    %449 = vmatprep.subr.mxu0 %v220
    %450 = vmatpush1.msra.mxu0 %v219
    %451 = vmatprep.subr.mxu0 %v216
    %452 = vmatpush1.msra.mxu0 %v215
    %453 = vmatprep.subr.mxu0 %v212
    %454 = vmatpush1.msra.mxu0 %v211
    %455 = vmatprep.subr.mxu0 %v208
    %456 = vmatpush1.msra.mxu0 %v207
    %457 = vmatprep.subr.mxu0 %v204
    %458 = vmatpush1.msra.mxu0 %v203
    %459 = vmatprep.subr.mxu0 %v200
    %460 = vmatpush1.msra.mxu0 %v199
    %461 = vmatprep.subr.mxu0 %v196
    %462 = vmatpush1.msra.mxu0 %v195
    %463 = vmatprep.subr.mxu0 %v192
    %464 = vmatpush1.msra.mxu0 %v191
    %465 = vmatprep.subr.mxu0 %v188
    %466 = vmatpush1.msra.mxu0 %v187
    %467 = vmatprep.subr.mxu0 %v184
    %468 = vmatpush1.msra.mxu0 %v183
    %469 = vmatprep.subr.mxu0 %v180
    %470 = vmatpush1.msra.mxu0 %v179
    %471 = vmatprep.subr.mxu0 %v176
    %472 = vmatpush1.msra.mxu0 %v175
    %473 = vmatprep.subr.mxu0 %v172
    %474 = vmatpush1.msra.mxu0 %v171
    %475 = vmatprep.subr.mxu0 %v168
    %476 = vmatpush1.msra.mxu0 %v167
    %477 = vmatprep.subr.mxu0 %v164
    %478 = vmatpush1.msra.mxu0 %v163
    %479 = vmatprep.subr.mxu0 %v288
    %480 = vmatpush2.msra.mxu0 %v287
    %481 = vmatprep.subr.mxu0 %v284
    %482 = vmatpush2.msra.mxu0 %v283
    %483 = vmatprep.subr.mxu0 %v280
    %484 = vmatpush2.msra.mxu0 %v279
    %485 = vmatprep.subr.mxu0 %v276
    %486 = vmatpush2.msra.mxu0 %v275
    %487 = vmatprep.subr.mxu0 %v272
    %488 = vmatpush2.msra.mxu0 %v271
    %489 = vmatprep.subr.mxu0 %v268
    %490 = vmatpush2.msra.mxu0 %v267
    %491 = vmatprep.subr.mxu0 %v264
    %492 = vmatpush2.msra.mxu0 %v263
    %493 = vmatprep.subr.mxu0 %v260
    %494 = vmatpush2.msra.mxu0 %v259
    %495 = vmatprep.subr.mxu0 %v256
    %496 = vmatpush2.msra.mxu0 %v255
    %497 = vmatprep.subr.mxu0 %v252
    %498 = vmatpush2.msra.mxu0 %v251
    %499 = vmatprep.subr.mxu0 %v248
    %500 = vmatpush2.msra.mxu0 %v247
    %501 = vmatprep.subr.mxu0 %v244
    %502 = vmatpush2.msra.mxu0 %v243
    %503 = vmatprep.subr.mxu0 %v240
    %504 = vmatpush2.msra.mxu0 %v239
    %505 = vmatprep.subr.mxu0 %v236
    %506 = vmatpush2.msra.mxu0 %v235
    %507 = vmatprep.subr.mxu0 %v232
    %508 = vmatpush2.msra.mxu0 %v231
    %509 = vmatprep.subr.mxu0 %v228
    %510 = vmatpush2.msra.mxu0 %v227
    %511 = vmatprep.mubr.f32.mxu0 %v144
    %512 = vmatmul.mubr.f32.gmra.mxu0 %v375
    %v513 = vpop.f32.mrf.mxu0
    %v514 = vadd.f32 0.0, %v513
    %v515 = vpop.f32.mrf.mxu0
    %v516 = vadd.f32 0.0, %v515
    %517 = vdwg.mxu0
    %v518 = vadd.f32 %v443, %v115
    %v519 = vadd.f32 %v445, %v119
    %v520 = vxor.u32 %v518, 2147483648
    %v521 = vxor.u32 %v519, 2147483648
    %v522 = vmul.f32 %v520, 1.442695
    %v523 = vpow.pop %v522
    %v524 = vmul.f32 %v521, 1.442695
    %v525 = vpow.pop %v524
    %v526 = vadd.f32 %v523, 1.0
    %v527 = vadd.f32 %v525, 1.0
    %v528 = vrcp.pop %v526
    %v529 = vmul.f32 1.0, %v528
    %v530 = vrcp.pop %v527
    %v531 = vmul.f32 1.0, %v530
    %v532 = vadd.f32 %v514, %v127
    %v533 = vadd.f32 %v516, %v134
    %v534 = vmul.f32 %v529, %v533
    %v535 = vadd.f32 %v532, %v534
    %v536 = vtanh.pop %v535
    %v537 = vsub.f32 1.0, %v531
    %v538 = vmul.f32 %v537, %v536
    %v539 = vmul.f32 %v531, %v144
    %v540 = vadd.f32 %v538, %v539
    %541 = vmatprep.subr.mxu0 0.0
    %542 = vmatpush1.msra.mxu0 %v304
    %543 = vmatprep.subr.mxu0 0.0
    %544 = vmatpush1.msra.mxu0 %v303
    %545 = vmatprep.subr.mxu0 0.0
    %546 = vmatpush1.msra.mxu0 %v302
    %547 = vmatprep.subr.mxu0 0.0
    %548 = vmatpush1.msra.mxu0 %v301
    %549 = vmatprep.subr.mxu0 0.0
    %550 = vmatpush1.msra.mxu0 %v300
    %551 = vmatprep.subr.mxu0 0.0
    %552 = vmatpush1.msra.mxu0 %v299
    %553 = vmatprep.subr.mxu0 0.0
    %554 = vmatpush1.msra.mxu0 %v298
    %555 = vmatprep.subr.mxu0 0.0
    %556 = vmatpush1.msra.mxu0 %v297
    %557 = vmatprep.subr.mxu0 0.0
    %558 = vmatpush1.msra.mxu0 %v296
    %559 = vmatprep.subr.mxu0 0.0
    %560 = vmatpush1.msra.mxu0 %v295
    %561 = vmatprep.subr.mxu0 0.0
    %562 = vmatpush1.msra.mxu0 %v294
    %563 = vmatprep.subr.mxu0 0.0
    %564 = vmatpush1.msra.mxu0 %v293
    %565 = vmatprep.subr.mxu0 0.0
    %566 = vmatpush1.msra.mxu0 %v292
    %567 = vmatprep.subr.mxu0 0.0
    %568 = vmatpush1.msra.mxu0 %v291
    %569 = vmatprep.subr.mxu0 0.0
    %570 = vmatpush1.msra.mxu0 %v290
    %571 = vmatprep.subr.mxu0 0.0
    %572 = vmatpush1.msra.mxu0 %v289
    %573 = vmatprep.subr.mxu0 0.0
    %574 = vmatpush2.msra.mxu0 0.0
    %575 = vmatprep.subr.mxu0 0.0
    %576 = vmatpush2.msra.mxu0 0.0
    %577 = vmatprep.subr.mxu0 0.0
    %578 = vmatpush2.msra.mxu0 0.0
    %579 = vmatprep.subr.mxu0 0.0
    %580 = vmatpush2.msra.mxu0 0.0
    %581 = vmatprep.subr.mxu0 0.0
    %582 = vmatpush2.msra.mxu0 0.0
    %583 = vmatprep.subr.mxu0 0.0
    %584 = vmatpush2.msra.mxu0 0.0
    %585 = vmatprep.subr.mxu0 0.0
    %586 = vmatpush2.msra.mxu0 0.0
    %587 = vmatprep.subr.mxu0 0.0
    %588 = vmatpush2.msra.mxu0 0.0
    %589 = vmatprep.subr.mxu0 0.0
    %590 = vmatpush2.msra.mxu0 0.0
    %591 = vmatprep.subr.mxu0 0.0
    %592 = vmatpush2.msra.mxu0 0.0
    %593 = vmatprep.subr.mxu0 0.0
    %594 = vmatpush2.msra.mxu0 0.0
    %595 = vmatprep.subr.mxu0 0.0
    %596 = vmatpush2.msra.mxu0 0.0
    %597 = vmatprep.subr.mxu0 0.0
    %598 = vmatpush2.msra.mxu0 0.0
    %599 = vmatprep.subr.mxu0 0.0
    %600 = vmatpush2.msra.mxu0 0.0
    %601 = vmatprep.subr.mxu0 0.0
    %602 = vmatpush2.msra.mxu0 0.0
    %603 = vmatprep.subr.mxu0 0.0
    %604 = vmatpush2.msra.mxu0 0.0
    %605 = vmatprep.mubr.f32.mxu0 0.0
    %606 = vmatmul.mubr.f32.gmra.mxu0 %v540
    %v607 = vpop.f32.mrf.mxu0
    %v608 = vadd.f32 %v141, %v607
    %v609 = vpop.f32.mrf.mxu0
    %610 = vdwg.mxu0
    %611 = vst [vmem:[#allocation11] sm:$0xff] %v608
    %612 = vst [vmem:[#allocation12] sm:$0xff] %v540
    // Predicated region
    $region62: #{tpu_custom_call.1} parent=1 // pred_check
      _
    $region63: #{tpu_custom_call.1} parent=1 // pred_check_branch
      %614 = sbr.rel (0) target = $region65
    $region64: #{tpu_custom_call.1} parent=1 // pred_region
      %s616 = ssub.s32 128, 128
      %617 = vsyncadd [#allocation4], %s616
      %s619 = sshll.u32 [#allocation11], 4
      %s620 = int_to_ptr.vmem [resolvable:$true] %s619
      %622 = dma.vmem_to_hbm [thread:$0]  %s620, 128, %s10, [#allocation4]
    $region65: #{tpu_custom_call.1} parent=1 // pred_fallthru
      _
    // Predicated region
    $region66: #{tpu_custom_call.1} parent=1 // pred_check
      _
    $region67: #{tpu_custom_call.1} parent=1 // pred_check_branch
      %624 = sbr.rel (0) target = $region69
    $region68: #{tpu_custom_call.1} parent=1 // pred_region
      %s626 = ssub.s32 128, 128
      %627 = vsyncadd [#allocation13], %s626
      %s629 = sshll.u32 [#allocation12], 4
      %s630 = int_to_ptr.vmem [resolvable:$true] %s629
      %632 = dma.vmem_to_hbm [thread:$0]  %s630, 128, %s11, [#allocation13]
    $region69: #{tpu_custom_call.1} parent=1 // pred_fallthru
      _
    // Predicated region
    $region70: #{tpu_custom_call.1} parent=1 // pred_check
      _
    $region71: #{tpu_custom_call.1} parent=1 // pred_check_branch
      %634 = sbr.rel (0) target = $region73
    $region72: #{tpu_custom_call.1} parent=1 // pred_region
      %635 = dma.done [#allocation4], 128
    $region73: #{tpu_custom_call.1} parent=1 // pred_fallthru
      _
    // Predicated region
    $region74: #{tpu_custom_call.1} parent=1 // pred_check
      _
    $region75: #{tpu_custom_call.1} parent=1 // pred_check_branch
      %637 = sbr.rel (0) target = $region77
    $region76: #{tpu_custom_call.1} parent=1 // pred_region
      %638 = dma.done [#allocation13], 128
    $region77: #{tpu_custom_call.1} parent=1 // pred_fallthru
      _
    %639 = vsyncpa [#allocation3], 1
    %640 = vsyncpa [#allocation6], 1
    %641 = vsyncpa [#allocation9], 1
    %642 = vsyncpa [#allocation4], 1
    %643 = vsyncpa [#allocation13], 1

</llo_original>
